<compile_context>
chip_gen: v6e
topology: v6e:2x2x1
jax: 0.10.0
libtpu: 0.0.40
codegen_flags: <defaults>
</compile_context>

<pallas_src>
import functools

import jax
import jax.numpy as jnp
from jax.experimental import pallas as pl
from jax.experimental.pallas import tpu as pltpu

_LANES = 128
_MAX_BLOCK_ROWS = 4096  # 4096 x 128 x 4B = 2 MiB per f32 input block


def _dice_sums_kernel(x_ref, t_ref, o_ref, *, block_rows, rows_valid, needs_mask):
    """Accumulates [sum(x*t), sum(x), sum(t)] per lane into o_ref (3, 128)."""
    i = pl.program_id(1)  # inner "arbitrary" (reduction) axis

    @pl.when(i == 0)
    def _init():
        o_ref[...] = jnp.zeros_like(o_ref)

    x = x_ref[...].astype(jnp.float32)
    t = t_ref[...].astype(jnp.float32)

    if needs_mask:
        # Global row index of each element's row; rows past the valid extent
        # (OOB / phantom blocks) are zeroed via select (NaN-safe).
        step = pl.program_id(0) * pl.num_programs(1) + i
        row0 = step * block_rows
        ridx = row0 + jax.lax.broadcasted_iota(jnp.int32, x.shape, 0)
        keep = ridx < rows_valid
        x = jnp.where(keep, x, 0.0)
        t = jnp.where(keep, t, 0.0)

    # Keep the lane axis: only a sublane fold per step (mostly VPU work),
    # accumulated into the VMEM-resident output block.
    o_ref[0:1, :] += jnp.sum(x * t, axis=0, keepdims=True)  # intersection
    o_ref[1:2, :] += jnp.sum(x, axis=0, keepdims=True)      # inputs.sum()
    o_ref[2:3, :] += jnp.sum(t, axis=0, keepdims=True)      # targets.sum()


def dice(inputs, targets, smooth=1.0):
    """Dice score over all elements of `inputs` and `targets` (matching shapes)."""
    assert inputs.shape == targets.shape
    n = inputs.size

    x = jnp.ravel(inputs)
    t = jnp.ravel(targets)

    # Only pad when numel is not lane-aligned (rare; at most 127 zeros, sum-safe).
    lane_pad = (-n) % _LANES
    if lane_pad:
        x = jnp.pad(x, (0, lane_pad))
        t = jnp.pad(t, (0, lane_pad))
    rows = (n + lane_pad) // _LANES
    x2 = x.reshape(rows, _LANES)
    t2 = t.reshape(rows, _LANES)

    # Block = whole array when small, else 4096-row (2 MiB f32) tiles.
    block_rows = rows if rows <= _MAX_BLOCK_ROWS else _MAX_BLOCK_ROWS
    total_steps = pl.cdiv(rows, block_rows)

    # Split the reduction across a leading parallel axis (both v7x cores).
    num_splits = 2 if total_steps >= 2 else 1
    steps_per_split = pl.cdiv(total_steps, num_splits)
    has_phantom = (num_splits * steps_per_split) != total_steps
    needs_mask = (num_splits * steps_per_split * block_rows) != rows

    if has_phantom:
        # Clamp phantom steps onto the last real block; they are fully masked
        # to zero inside the kernel, so the duplicated read is harmless.
        def in_map(c, i):
            return (jnp.minimum(c * steps_per_split + i, total_steps - 1), 0)
    else:
        def in_map(c, i):
            return (c * steps_per_split + i, 0)

    kernel = functools.partial(
        _dice_sums_kernel,
        block_rows=block_rows,
        rows_valid=rows,
        needs_mask=needs_mask,
    )

    partial_sums = pl.pallas_call(
        kernel,
        out_shape=jax.ShapeDtypeStruct((num_splits, 3, _LANES), jnp.float32),
        grid_spec=pltpu.PrefetchScalarGridSpec(
            num_scalar_prefetch=0,
            grid=(num_splits, steps_per_split),
            in_specs=[
                pl.BlockSpec((block_rows, _LANES), in_map),
                pl.BlockSpec((block_rows, _LANES), in_map),
            ],
            out_specs=pl.BlockSpec((None, 3, _LANES), lambda c, i: (c, 0, 0)),
        ),
        compiler_params=pltpu.CompilerParams(
            dimension_semantics=("parallel", "arbitrary"),
            vmem_limit_bytes=32 * 1024 * 1024,
        ),
    )(x2, t2)

    # Final cross-lane / cross-core reduce + epilogue in plain JAX (tiny).
    s = jnp.sum(partial_sums, axis=(0, 2))  # (3,) = [intersection, sum_x, sum_t]
    return (2.0 * s[0] + smooth) / (s[1] + s[2] + smooth)


if __name__ == "__main__":
    key = jax.random.PRNGKey(0)
    k1, k2 = jax.random.split(key)

    # Small shapes consistent with a segmentation-style forward: NCHW.
    B, C, H, W = 2, 4, 16, 16
    inputs = jax.nn.sigmoid(jax.random.normal(k1, (B, C, H, W), dtype=jnp.float32))
    targets = (jax.random.uniform(k2, (B, C, H, W)) > 0.5).astype(jnp.float32)

    result = dice(inputs, targets, smooth=1.0)
    result = jax.block_until_ready(result)

    # Pure-JAX reference check.
    inter = jnp.sum(inputs * targets)
    ref = (2.0 * inter + 1.0) / (jnp.sum(inputs) + jnp.sum(targets) + 1.0)
    assert jnp.allclose(result, ref, rtol=1e-5, atol=1e-6), (result, ref)

    print("KERNEL_OK")
</pallas_src>

<mosaic_0001>
module attributes {stable_mosaic.version = 11 : i64} {
  func.func @_dice_sums_kernel(%arg0: i32, %arg1: i32, %arg2: memref<16x128xf32, #tpu.memory_space<vmem>>, %arg3: memref<16x128xf32, #tpu.memory_space<vmem>>, %arg4: memref<1x3x128xf32, #tpu.memory_space<vmem>>) attributes {dimension_semantics = [#tpu.dimension_semantics<parallel>, #tpu.dimension_semantics<arbitrary>], iteration_bounds = array<i64: 1, 1>, scalar_prefetch = 0 : i64, scratch_operands = 0 : i64, tpu.core_type = #tpu.core_type<tc>, window_params = [{transform_indices = @transform_0, window_bounds = array<i64: 16, 128>}, {transform_indices = @transform_1, window_bounds = array<i64: 16, 128>}, {transform_indices = @transform_2, window_bounds = array<i64: 1, 3, 128>}]} {
    %c0_i32 = arith.constant 0 : i32
    %0 = arith.cmpi eq, %arg1, %c0_i32 : i32
    %1 = arith.extui %0 : i1 to i32
    %c0_i32_0 = arith.constant 0 : i32
    %2 = arith.cmpi ne, %1, %c0_i32_0 : i32
    scf.if %2 {
      %cst_22 = arith.constant 0.000000e+00 : f32
      %30 = vector.broadcast %cst_22 : f32 to vector<3x128xf32>
      %c0_23 = arith.constant 0 : index
      %c0_24 = arith.constant 0 : index
      %c0_25 = arith.constant 0 : index
      %31 = vector.load %arg4[%c0_23, %c0_24, %c0_25] : memref<1x3x128xf32, #tpu.memory_space<vmem>>, vector<1x3x128xf32>
      %32 = vector.shape_cast %31 : vector<1x3x128xf32> to vector<3x128xf32>
      %33 = vector.shape_cast %30 : vector<3x128xf32> to vector<1x3x128xf32>
      tpu.vector_store %arg4[%c0_23, %c0_24, %c0_25], %33 {strides = array<i32>} : memref<1x3x128xf32, #tpu.memory_space<vmem>>, vector<1x3x128xf32>,
    } else {
    }
    %c0 = arith.constant 0 : index
    %c0_1 = arith.constant 0 : index
    %3 = vector.load %arg2[%c0, %c0_1] : memref<16x128xf32, #tpu.memory_space<vmem>>, vector<16x128xf32>
    %c0_2 = arith.constant 0 : index
    %c0_3 = arith.constant 0 : index
    %4 = vector.load %arg3[%c0_2, %c0_3] : memref<16x128xf32, #tpu.memory_space<vmem>>, vector<16x128xf32>
    %c0_4 = arith.constant 0 : index
    %c0_5 = arith.constant 0 : index
    %c0_6 = arith.constant 0 : index
    %5 = vector.load %arg4[%c0_4, %c0_5, %c0_6] : memref<1x3x128xf32, #tpu.memory_space<vmem>>, vector<1x1x128xf32>
    %6 = vector.shape_cast %5 : vector<1x1x128xf32> to vector<1x128xf32>
    %7 = arith.mulf %3, %4 : vector<16x128xf32>
    %cst = arith.constant dense<0.000000e+00> : vector<128xf32>
    %8 = vector.multi_reduction <add>, %7, %cst [0] : vector<16x128xf32> to vector<128xf32>
    %9 = vector.shape_cast %8 : vector<128xf32> to vector<1x128xf32>
    %10 = arith.addf %6, %9 : vector<1x128xf32>
    %c0_7 = arith.constant 0 : index
    %c0_8 = arith.constant 0 : index
    %c0_9 = arith.constant 0 : index
    %11 = vector.load %arg4[%c0_7, %c0_8, %c0_9] : memref<1x3x128xf32, #tpu.memory_space<vmem>>, vector<1x1x128xf32>
    %12 = vector.shape_cast %11 : vector<1x1x128xf32> to vector<1x128xf32>
    %13 = vector.shape_cast %10 : vector<1x128xf32> to vector<1x1x128xf32>
    tpu.vector_store %arg4[%c0_7, %c0_8, %c0_9], %13 {strides = array<i32>} : memref<1x3x128xf32, #tpu.memory_space<vmem>>, vector<1x1x128xf32>,
    %c0_10 = arith.constant 0 : index
    %c1 = arith.constant 1 : index
    %c0_11 = arith.constant 0 : index
    %14 = vector.load %arg4[%c0_10, %c1, %c0_11] : memref<1x3x128xf32, #tpu.memory_space<vmem>>, vector<1x1x128xf32>
    %15 = vector.shape_cast %14 : vector<1x1x128xf32> to vector<1x128xf32>
    %cst_12 = arith.constant dense<0.000000e+00> : vector<128xf32>
    %16 = vector.multi_reduction <add>, %3, %cst_12 [0] : vector<16x128xf32> to vector<128xf32>
    %17 = vector.shape_cast %16 : vector<128xf32> to vector<1x128xf32>
    %18 = arith.addf %15, %17 : vector<1x128xf32>
    %c0_13 = arith.constant 0 : index
    %c1_14 = arith.constant 1 : index
    %c0_15 = arith.constant 0 : index
    %19 = vector.load %arg4[%c0_13, %c1_14, %c0_15] : memref<1x3x128xf32, #tpu.memory_space<vmem>>, vector<1x1x128xf32>
    %20 = vector.shape_cast %19 : vector<1x1x128xf32> to vector<1x128xf32>
    %21 = vector.shape_cast %18 : vector<1x128xf32> to vector<1x1x128xf32>
    tpu.vector_store %arg4[%c0_13, %c1_14, %c0_15], %21 {strides = array<i32>} : memref<1x3x128xf32, #tpu.memory_space<vmem>>, vector<1x1x128xf32>,
    %c0_16 = arith.constant 0 : index
    %c2 = arith.constant 2 : index
    %c0_17 = arith.constant 0 : index
    %22 = vector.load %arg4[%c0_16, %c2, %c0_17] : memref<1x3x128xf32, #tpu.memory_space<vmem>>, vector<1x1x128xf32>
    %23 = vector.shape_cast %22 : vector<1x1x128xf32> to vector<1x128xf32>
    %cst_18 = arith.constant dense<0.000000e+00> : vector<128xf32>
    %24 = vector.multi_reduction <add>, %4, %cst_18 [0] : vector<16x128xf32> to vector<128xf32>
    %25 = vector.shape_cast %24 : vector<128xf32> to vector<1x128xf32>
    %26 = arith.addf %23, %25 : vector<1x128xf32>
    %c0_19 = arith.constant 0 : index
    %c2_20 = arith.constant 2 : index
    %c0_21 = arith.constant 0 : index
    %27 = vector.load %arg4[%c0_19, %c2_20, %c0_21] : memref<1x3x128xf32, #tpu.memory_space<vmem>>, vector<1x1x128xf32>
    %28 = vector.shape_cast %27 : vector<1x1x128xf32> to vector<1x128xf32>
    %29 = vector.shape_cast %26 : vector<1x128xf32> to vector<1x1x128xf32>
    tpu.vector_store %arg4[%c0_19, %c2_20, %c0_21], %29 {strides = array<i32>} : memref<1x3x128xf32, #tpu.memory_space<vmem>>, vector<1x1x128xf32>,
    return
  }
  func.func @transform_0(%arg0: i32, %arg1: i32) -> (i32, i32) {
    %c1_i32 = arith.constant 1 : i32
    %0 = arith.muli %arg0, %c1_i32 : i32
    %1 = arith.addi %0, %arg1 : i32
    %c0_i32 = arith.constant 0 : i32
    %c0_i32_0 = arith.constant 0 : i32
    return %1, %c0_i32 : i32, i32
  }
  func.func @transform_1(%arg0: i32, %arg1: i32) -> (i32, i32) {
    %c1_i32 = arith.constant 1 : i32
    %0 = arith.muli %arg0, %c1_i32 : i32
    %1 = arith.addi %0, %arg1 : i32
    %c0_i32 = arith.constant 0 : i32
    %c0_i32_0 = arith.constant 0 : i32
    return %1, %c0_i32 : i32, i32
  }
  func.func @transform_2(%arg0: i32, %arg1: i32) -> (i32, i32, i32) {
    %c0_i32 = arith.constant 0 : i32
    %c0_i32_0 = arith.constant 0 : i32
    %c0_i32_1 = arith.constant 0 : i32
    return %arg0, %c0_i32, %c0_i32_0 : i32, i32, i32
  }
}

</mosaic_0001>

<llo_original>
// kernel: tpu_custom_call.1
$region0: #{tpu_custom_call.1}
  #allocation0 [shape = 'u32[]', space=smem, size = 0x4, offset = 0x4, fixed_abs, tag = 'smem constant byte address 0x4 - core index']
  #allocation1 [shape = 'u32[144,128]{1,0:T(1,128)}', space=vmem, size = 0x12000, scoped, tag = 'internal scratch']
  %s0 = inlined_call_operand.hbm [shape: f32[16,128], index: 0, kind: input, shape index: {}]
  %s1 = inlined_call_operand.hbm [shape: f32[16,128], index: 1, kind: input, shape index: {}]
  %s2 = inlined_call_operand.vmem [shape: f32[1,3,128], index: 2, kind: output, shape index: {}]
  %s3 = sld [smem:[#allocation0]]
  $region30: #{tpu_custom_call.1} parent=0
    _
  %s5 = ssub.s32 1, %s3
  %s6 = scalar_select 0, %s5, %s3
  $region1: #{tpu_custom_call.1} parent=0
    #allocation2 [shape = 'u8[8192]{0}', space=vmem, size = 0x2000, scoped, tag = 'input window, operand 0, single buffered']
    #allocation3 [shape = 's32[1]{0}', space=sflag, size = 0x4, scoped, tag = 'scoped memory for tpu_custom_call.1']
    #allocation4 [shape = 'u8[8192]{0}', space=vmem, size = 0x2000, scoped, tag = 'input window, operand 1, single buffered']
    #allocation5 [shape = 's32[1]{0}', space=sflag, size = 0x4, scoped, tag = 'scoped memory for tpu_custom_call.1']
    %7 = vsyncpa [#allocation3], 0
    %8 = vsyncpa [#allocation5], 0
    // Predicated region
    $region2: #{tpu_custom_call.1} parent=1 // pred_check
      _
    $region3: #{tpu_custom_call.1} parent=1 // pred_check_branch
      %10 = sbr.rel (0) target = $region5
    $region4: #{tpu_custom_call.1} parent=1 // pred_region
      %s11 = sadd.s32 0, 0
      %s12 = smul.u32 2, %s11
      %s14 = ssub.s32 256, 256
      %15 = vsyncadd [#allocation3], %s14
      %s16 = smul.addr %s12, 128
      %s17 = scalar_lea.hbm %s0, %s16
      %s18 = sshll.u32 [#allocation2], 4
      %s19 = int_to_ptr.vmem [resolvable:$true] %s18
      %24 = dma.hbm_to_vmem [thread:$0]  %s17, 256, %s19, [#allocation3], 128, 128, 8
    $region5: #{tpu_custom_call.1} parent=1 // pred_fallthru
      _
    // Predicated region
    $region6: #{tpu_custom_call.1} parent=1 // pred_check
      _
    $region7: #{tpu_custom_call.1} parent=1 // pred_check_branch
      %26 = sbr.rel (0) target = $region9
    $region8: #{tpu_custom_call.1} parent=1 // pred_region
      %s27 = sadd.s32 0, 0
      %s28 = smul.u32 2, %s27
      %s30 = ssub.s32 256, 256
      %31 = vsyncadd [#allocation5], %s30
      %s32 = smul.addr %s28, 128
      %s33 = scalar_lea.hbm %s1, %s32
      %s34 = sshll.u32 [#allocation4], 4
      %s35 = int_to_ptr.vmem [resolvable:$true] %s34
      %40 = dma.hbm_to_vmem [thread:$0]  %s33, 256, %s35, [#allocation5], 128, 128, 8
    $region9: #{tpu_custom_call.1} parent=1 // pred_fallthru
      _
    // Predicated region
    $region10: #{tpu_custom_call.1} parent=1 // pred_check
      _
    $region11: #{tpu_custom_call.1} parent=1 // pred_check_branch
      %42 = sbr.rel (0) target = $region13
    $region12: #{tpu_custom_call.1} parent=1 // pred_region
      %43 = dma.done [#allocation3], 256
    $region13: #{tpu_custom_call.1} parent=1 // pred_fallthru
      _
    // Predicated region
    $region14: #{tpu_custom_call.1} parent=1 // pred_check
      _
    $region15: #{tpu_custom_call.1} parent=1 // pred_check_branch
      %45 = sbr.rel (0) target = $region17
    $region16: #{tpu_custom_call.1} parent=1 // pred_region
      %46 = dma.done [#allocation5], 256
    $region17: #{tpu_custom_call.1} parent=1 // pred_fallthru
      _
    %s47 = sadd.s32 0, 0
    %s48 = smul.u32 2, %s47
    %s49 = sadd.s32 0, 0
    %s50 = smul.u32 2, %s49
    %p51 = scmp.eq.s32.totalorder 0, 0
    // Predicated region
    $region18: #{tpu_custom_call.1} parent=1 // pred_check
      %p52 = pneg %p51
    $region19: #{tpu_custom_call.1} parent=1 // pred_check_branch
      %54 = sbr.rel (%p52) target = $region21
    $region20: #{tpu_custom_call.1} parent=1 // pred_region
      %55 = vst [vmem:[%s2] sm:$0x7] 0.0
    $region21: #{tpu_custom_call.1} parent=1 // pred_fallthru
      _
    %v56 = vld [vmem:[#allocation2] sm:$0xff]
    %v57 = vld [vmem:[#allocation2 + $0x8] sm:$0xff]
    %v58 = vld [vmem:[#allocation4] sm:$0xff]
    %v59 = vld [vmem:[#allocation4 + $0x8] sm:$0xff]
    %v60 = vld [vmem:[%s2] sm:$0x1]
    %v61 = vmul.f32 %v56, %v58
    %v62 = vmul.f32 %v57, %v59
    %v63 = vadd.f32 %v61, %v62
    %v64 = vrot.slane %v63, 4
    %v65 = vadd.f32 %v63, %v64
    %v66 = vrot.slane %v65, 2
    %v67 = vadd.f32 %v65, %v66
    %v68 = vrot.slane %v67, 1
    %v69 = vadd.f32 %v67, %v68
    %v70 = vadd.f32 %v60, %v69
    %71 = vst [vmem:[%s2] sm:$0x1] %v70
    %v72 = vld [vmem:[%s2 + $0x1] sm:$0x1]
    %v73 = vadd.f32 %v56, %v57
    %v74 = vrot.slane %v73, 4
    %v75 = vadd.f32 %v73, %v74
    %v76 = vrot.slane %v75, 2
    %v77 = vadd.f32 %v75, %v76
    %v78 = vrot.slane %v77, 1
    %v79 = vadd.f32 %v77, %v78
    %v80 = vadd.f32 %v72, %v79
    %81 = vst [vmem:[%s2 + $0x1] sm:$0x1] %v80
    %v82 = vld [vmem:[%s2 + $0x2] sm:$0x1]
    %v83 = vadd.f32 %v58, %v59
    %v84 = vrot.slane %v83, 4
    %v85 = vadd.f32 %v83, %v84
    %v86 = vrot.slane %v85, 2
    %v87 = vadd.f32 %v85, %v86
    %v88 = vrot.slane %v87, 1
    %v89 = vadd.f32 %v87, %v88
    %v90 = vadd.f32 %v82, %v89
    %91 = vst [vmem:[%s2 + $0x2] sm:$0x1] %v90
    // Predicated region
    $region22: #{tpu_custom_call.1} parent=1 // pred_check
      _
    $region23: #{tpu_custom_call.1} parent=1 // pred_check_branch
      %93 = sbr.rel (0) target = $region25
    $region24: #{tpu_custom_call.1} parent=1 // pred_region
      _
    $region25: #{tpu_custom_call.1} parent=1 // pred_fallthru
      _
    // Predicated region
    $region26: #{tpu_custom_call.1} parent=1 // pred_check
      _
    $region27: #{tpu_custom_call.1} parent=1 // pred_check_branch
      %95 = sbr.rel (0) target = $region29
    $region28: #{tpu_custom_call.1} parent=1 // pred_region
      _
    $region29: #{tpu_custom_call.1} parent=1 // pred_fallthru
      _
    %96 = vsyncpa [#allocation3], 1
    %97 = vsyncpa [#allocation5], 1

</llo_original>
